<compile_context>
chip_gen: v6e
topology: v6e:2x2x1
jax: 0.10.0
libtpu: 0.0.40
codegen_flags: <defaults>
</compile_context>

<pallas_src>
import functools

import jax
import jax.numpy as jnp
from jax.experimental import pallas as pl
from jax.experimental.pallas import tpu as pltpu


def _round_up(v, m):
    return (v + m - 1) // m * m


def _cdiv(a, b):
    return (a + b - 1) // b


# --------------------------------------------------------------------------- #
# Kernel
# --------------------------------------------------------------------------- #
def mlp_residual_kernel(x_ref, w1cat_ref, b1cat_ref, w2_ref, gb_ref, o_ref,
                        *, hidden_p: int, out_valid: int,
                        layernorm: bool, eps: float):
    # Operands feed the MXU in their native dtype; f32 accumulation via
    # preferred_element_type (no VPU upcast traffic on the wide matmuls).
    x = x_ref[...]

    # Fused first stage: x @ [W1 | Wskip] as ONE wide MXU matmul (shared LHS).
    # The skip-half bias already includes b2 (folded at pack time).
    t = jnp.dot(x, w1cat_ref[...], preferred_element_type=jnp.float32)
    t = t + b1cat_ref[...].astype(jnp.float32)

    h = jnp.maximum(t[:, :hidden_p], 0.0)                  # lin1 + ReLU (lane-aligned)
    ys = t[:, hidden_p:hidden_p + out_valid]               # skip + (bs + b2), valid cols

    # lin2 (dropout = identity in eval mode); full 128-wide MXU, slice after.
    y = jnp.dot(h.astype(w2_ref.dtype), w2_ref[...],
                preferred_element_type=jnp.float32)

    out = y[:, :out_valid] + ys                            # (block_b, out_dim), f32

    if layernorm:
        # Exact two-pass LayerNorm over the TRUE out_dim (no padded columns left).
        mean = jnp.mean(out, axis=-1, keepdims=True)
        centered = out - mean
        var = jnp.mean(centered * centered, axis=-1, keepdims=True)
        inv = jax.lax.rsqrt(var + eps)
        gamma = gb_ref[0:1, :].astype(jnp.float32)
        beta = gb_ref[1:2, :].astype(jnp.float32)
        out = centered * inv * gamma + beta

    # Unpadded store: o_ref block is (block_b, out_dim) == full output width.
    o_ref[...] = out.astype(o_ref.dtype)


# --------------------------------------------------------------------------- #
# One-time weight packing (pad to lane-dense widths, fuse [W1 | Wskip], fold b2)
# --------------------------------------------------------------------------- #
def pack_params(params):
    in_dim, hidden = params["w1"].shape
    out_dim = params["w2"].shape[1]
    hidden_p = _round_up(hidden, 128)
    out_p = _round_up(out_dim, 128)

    def pad2(a, rows, cols):
        return jnp.pad(a, ((0, rows - a.shape[0]), (0, cols - a.shape[1])))

    w1cat = jnp.concatenate([pad2(params["w1"], in_dim, hidden_p),
                             pad2(params["ws"], in_dim, out_p)], axis=1)
    bs_comb = params["bs"] + params["b2"]                      # fold b2 into skip bias
    b1cat = jnp.concatenate([pad2(params["b1"], 1, hidden_p),
                             pad2(bs_comb, 1, out_p)], axis=1)
    w2p = pad2(params["w2"], hidden_p, out_p)
    gb = jnp.concatenate([params["gamma"], params["beta"]], axis=0)   # (2, out_dim), unpadded

    return dict(w1cat=w1cat, b1cat=b1cat, w2p=w2p, gb=gb,
                in_dim=in_dim, hidden_p=hidden_p, out_p=out_p, out_dim=out_dim)


# --------------------------------------------------------------------------- #
# Wrapper
# --------------------------------------------------------------------------- #
def mlp_residual(x, packed, *, layernorm=True, eps=1e-5, block_b=None):
    """x: [B, input_dim] -> [B, output_dim].  Dropout is eval-mode identity."""
    B, in_dim = x.shape
    assert in_dim == packed["in_dim"]
    hidden_p = packed["hidden_p"]
    out_p = packed["out_p"]
    out_dim = packed["out_dim"]
    w1cat, b1cat, w2p, gb = packed["w1cat"], packed["b1cat"], packed["w2p"], packed["gb"]

    itemsize = jnp.dtype(x.dtype).itemsize
    sub = {4: 8, 2: 16, 1: 32}.get(itemsize, 8)

    # ---- generation-aware VMEM budget ----
    try:
        vmem_cap = int(getattr(pltpu.get_tpu_info(), "vmem_capacity_bytes", 64 << 20))
    except Exception:  # pragma: no cover - conservative fallback
        vmem_cap = 64 << 20
    vmem_budget = int(vmem_cap * 0.70)          # ~90 MiB on v5e/v6e, ~45 MiB on v7x

    # ---- batch tiling ----
    if block_b is None:
        # ~1 MiB of x+out traffic per grid step amortizes the ~0.35 us step overhead.
        bytes_per_row = max((in_dim + out_dim) * itemsize, 1)
        rows_1mib = _cdiv(1 << 20, bytes_per_row)
        block_b = min(_round_up(rows_1mib, sub), 4096)
        # Keep >= ~8 grid steps so v7x megacore splits the axis AND each core
        # still has multiple steps for DMA/compute overlap (also fine on 1-TC chips).
        block_b = min(block_b, _round_up(_cdiv(B, 8), sub))
    block_b = max(_round_up(block_b, sub), sub)
    block_b = min(block_b, _round_up(B, sub))

    def vmem_footprint(bb):
        w_bytes = w1cat.nbytes + b1cat.nbytes + w2p.nbytes + gb.nbytes   # single-buffered
        io_bytes = 2 * bb * (in_dim + out_dim) * itemsize                # double-buffered tiles
        tmp_bytes = 2 * bb * (hidden_p + 2 * out_p) * 4                  # f32 intermediates
        return w_bytes + io_bytes + tmp_bytes

    while vmem_footprint(block_b) > vmem_budget and block_b > sub:
        block_b = max(_round_up(block_b // 2, sub), sub)

    grid = (_cdiv(B, block_b),)
    vmem_limit = int(min(max(1.5 * vmem_footprint(block_b) + (4 << 20), 32 << 20),
                         int(vmem_cap * 0.75)))

    kernel = functools.partial(mlp_residual_kernel, hidden_p=hidden_p,
                               out_valid=out_dim, layernorm=layernorm, eps=eps)

    # Grid-invariant params: single-buffered (same block every grid step).
    def const_spec(shape):
        return pl.BlockSpec(shape, lambda i: (0, 0), pipeline_mode=pl.Buffered(1))

    flops = 2 * B * in_dim * (hidden_p + out_p) + 2 * B * hidden_p * out_p
    bytes_accessed = (x.nbytes + B * out_dim * itemsize
                      + w1cat.nbytes + b1cat.nbytes + w2p.nbytes + gb.nbytes)
    cost = pl.CostEstimate(flops=flops,
                           transcendentals=B if layernorm else 0,
                           bytes_accessed=bytes_accessed)

    return pl.pallas_call(
        kernel,
        out_shape=jax.ShapeDtypeStruct((B, out_dim), x.dtype),
        grid_spec=pltpu.PrefetchScalarGridSpec(
            num_scalar_prefetch=0,
            grid=grid,
            in_specs=[
                pl.BlockSpec((block_b, in_dim), lambda i: (i, 0)),   # x tile (pipelined)
                const_spec((in_dim, hidden_p + out_p)),              # [W1 | Wskip]
                const_spec((1, hidden_p + out_p)),                   # [b1 | bs+b2]
                const_spec((hidden_p, out_p)),                       # W2
                const_spec((2, out_dim)),                            # [gamma; beta]
            ],
            out_specs=pl.BlockSpec((block_b, out_dim), lambda i: (i, 0)),
        ),
        compiler_params=pltpu.CompilerParams(
            dimension_semantics=("parallel",),
            vmem_limit_bytes=vmem_limit,
        ),
        cost_estimate=cost,
    )(x, w1cat, b1cat, w2p, gb)


# --------------------------------------------------------------------------- #
# Reference / params / demo
# --------------------------------------------------------------------------- #
def reference(x, params, *, layernorm=True, eps=1e-5):
    xf = x.astype(jnp.float32)
    h = jnp.maximum(xf @ params["w1"] + params["b1"], 0.0)
    y = h @ params["w2"] + params["b2"]
    ys = xf @ params["ws"] + params["bs"]
    out = y + ys
    if layernorm:
        mean = out.mean(-1, keepdims=True)
        var = ((out - mean) ** 2).mean(-1, keepdims=True)
        out = (out - mean) / jnp.sqrt(var + eps)
        out = out * params["gamma"] + params["beta"]
    return out.astype(x.dtype)


def init_params(key, input_dim, hidden_size, output_dim, dtype=jnp.float32):
    ks = jax.random.split(key, 6)

    def lin(kw, kb, fan_in, fan_out):
        bound = 1.0 / (fan_in ** 0.5)
        w = jax.random.uniform(kw, (fan_in, fan_out), dtype, -bound, bound)
        b = jax.random.uniform(kb, (1, fan_out), dtype, -bound, bound)
        return w, b

    w1, b1 = lin(ks[0], ks[1], input_dim, hidden_size)
    w2, b2 = lin(ks[2], ks[3], hidden_size, output_dim)
    ws, bs = lin(ks[4], ks[5], input_dim, output_dim)
    gamma = jnp.ones((1, output_dim), dtype)
    beta = jnp.zeros((1, output_dim), dtype)
    return dict(w1=w1, b1=b1, w2=w2, b2=b2, ws=ws, bs=bs, gamma=gamma, beta=beta)


if __name__ == "__main__":
    key = jax.random.PRNGKey(0)
    kx, kp = jax.random.split(key)

    # Small feature dims (per the module), batch large enough for a multi-step grid.
    B, INPUT_DIM, HIDDEN, OUTPUT_DIM = 512, 16, 32, 16
    x = jax.random.normal(kx, (B, INPUT_DIM), jnp.float32)
    params = init_params(kp, INPUT_DIM, HIDDEN, OUTPUT_DIM)
    packed = pack_params(params)          # pad/pack ONCE, reused across calls

    # LayerNorm path.
    out = jax.block_until_ready(mlp_residual(x, packed, layernorm=True))
    ref = reference(x, params, layernorm=True)
    assert out.shape == (B, OUTPUT_DIM)
    assert jnp.allclose(out, ref, atol=1e-4, rtol=1e-4), float(jnp.abs(out - ref).max())

    # No-LayerNorm path.
    out2 = jax.block_until_ready(mlp_residual(x, packed, layernorm=False))
    ref2 = reference(x, params, layernorm=False)
    assert jnp.allclose(out2, ref2, atol=1e-4, rtol=1e-4), float(jnp.abs(out2 - ref2).max())

    print("KERNEL_OK")
</pallas_src>

<mosaic_0001>
module attributes {stable_mosaic.version = 11 : i64} {
  func.func @mlp_residual_kernel(%arg0: i32, %arg1: memref<64x16xf32, #tpu.memory_space<vmem>>, %arg2: memref<16x256xf32, #tpu.memory_space<vmem>>, %arg3: memref<1x256xf32, #tpu.memory_space<vmem>>, %arg4: memref<128x128xf32, #tpu.memory_space<vmem>>, %arg5: memref<2x16xf32, #tpu.memory_space<vmem>>, %arg6: memref<64x16xf32, #tpu.memory_space<vmem>>) attributes {dimension_semantics = [#tpu.dimension_semantics<parallel>], iteration_bounds = array<i64: 8>, scalar_prefetch = 0 : i64, scratch_operands = 0 : i64, tpu.core_type = #tpu.core_type<tc>, window_params = [{transform_indices = @transform_0, window_bounds = array<i64: 64, 16>}, {pipeline_mode = #tpu.pipeline_mode<synchronous>, transform_indices = @transform_1, window_bounds = array<i64: 16, 256>}, {pipeline_mode = #tpu.pipeline_mode<synchronous>, transform_indices = @transform_2, window_bounds = array<i64: 1, 256>}, {pipeline_mode = #tpu.pipeline_mode<synchronous>, transform_indices = @transform_3, window_bounds = array<i64: 128, 128>}, {pipeline_mode = #tpu.pipeline_mode<synchronous>, transform_indices = @transform_4, window_bounds = array<i64: 2, 16>}, {transform_indices = @transform_5, window_bounds = array<i64: 64, 16>}]} {
    %c0 = arith.constant 0 : index
    %c0_0 = arith.constant 0 : index
    %0 = vector.load %arg1[%c0, %c0_0] : memref<64x16xf32, #tpu.memory_space<vmem>>, vector<64x16xf32>
    %c0_1 = arith.constant 0 : index
    %c0_2 = arith.constant 0 : index
    %1 = vector.load %arg2[%c0_1, %c0_2] : memref<16x256xf32, #tpu.memory_space<vmem>>, vector<16x256xf32>
    %cst = arith.constant dense<0.000000e+00> : vector<64x256xf32>
    %2 = tpu.matmul %0, %1, %cst {dimension_numbers = #tpu.dot_dimension_numbers<[1], [0], [0], [1], [0, 0, 1, 1], [], []>} : vector<64x16xf32>, vector<16x256xf32>, vector<64x256xf32> -> vector<64x256xf32>
    %c0_3 = arith.constant 0 : index
    %c0_4 = arith.constant 0 : index
    %3 = vector.load %arg3[%c0_3, %c0_4] : memref<1x256xf32, #tpu.memory_space<vmem>>, vector<1x256xf32>
    %4 = vector.broadcast %3 : vector<1x256xf32> to vector<64x256xf32>
    %5 = arith.addf %2, %4 : vector<64x256xf32>
    %6 = vector.extract_strided_slice %5 {offsets = [0, 0], sizes = [64, 128], strides = [1, 1]} : vector<64x256xf32> to vector<64x128xf32>
    %cst_5 = arith.constant 0.000000e+00 : f32
    %7 = vector.broadcast %cst_5 : f32 to vector<64x128xf32>
    %8 = arith.maximumf %6, %7 : vector<64x128xf32>
    %9 = vector.extract_strided_slice %5 {offsets = [0, 128], sizes = [64, 16], strides = [1, 1]} : vector<64x256xf32> to vector<64x16xf32>
    %c0_6 = arith.constant 0 : index
    %c0_7 = arith.constant 0 : index
    %10 = vector.load %arg4[%c0_6, %c0_7] : memref<128x128xf32, #tpu.memory_space<vmem>>, vector<128x128xf32>
    %cst_8 = arith.constant dense<0.000000e+00> : vector<64x128xf32>
    %11 = tpu.matmul %8, %10, %cst_8 {dimension_numbers = #tpu.dot_dimension_numbers<[1], [0], [0], [1], [0, 0, 1, 1], [], []>} : vector<64x128xf32>, vector<128x128xf32>, vector<64x128xf32> -> vector<64x128xf32>
    %12 = vector.extract_strided_slice %11 {offsets = [0, 0], sizes = [64, 16], strides = [1, 1]} : vector<64x128xf32> to vector<64x16xf32>
    %13 = arith.addf %12, %9 : vector<64x16xf32>
    %cst_9 = arith.constant dense<0.000000e+00> : vector<64xf32>
    %14 = vector.multi_reduction <add>, %13, %cst_9 [1] : vector<64x16xf32> to vector<64xf32>
    %15 = vector.shape_cast %14 : vector<64xf32> to vector<64x1xf32>
    %cst_10 = arith.constant 1.600000e+01 : f32
    %16 = vector.broadcast %cst_10 : f32 to vector<64x1xf32>
    %17 = arith.divf %15, %16 : vector<64x1xf32>
    %18 = vector.broadcast %17 : vector<64x1xf32> to vector<64x16xf32>
    %19 = arith.subf %13, %18 : vector<64x16xf32>
    %20 = arith.mulf %19, %19 : vector<64x16xf32>
    %cst_11 = arith.constant dense<0.000000e+00> : vector<64xf32>
    %21 = vector.multi_reduction <add>, %20, %cst_11 [1] : vector<64x16xf32> to vector<64xf32>
    %22 = vector.shape_cast %21 : vector<64xf32> to vector<64x1xf32>
    %cst_12 = arith.constant 1.600000e+01 : f32
    %23 = vector.broadcast %cst_12 : f32 to vector<64x1xf32>
    %24 = arith.divf %22, %23 : vector<64x1xf32>
    %cst_13 = arith.constant 9.99999974E-6 : f32
    %25 = vector.broadcast %cst_13 : f32 to vector<64x1xf32>
    %26 = arith.addf %24, %25 : vector<64x1xf32>
    %27 = math.rsqrt %26 : vector<64x1xf32>
    %c0_14 = arith.constant 0 : index
    %c0_15 = arith.constant 0 : index
    %28 = vector.load %arg5[%c0_14, %c0_15] : memref<2x16xf32, #tpu.memory_space<vmem>>, vector<1x16xf32>
    %c1 = arith.constant 1 : index
    %c0_16 = arith.constant 0 : index
    %29 = vector.load %arg5[%c1, %c0_16] : memref<2x16xf32, #tpu.memory_space<vmem>>, vector<1x16xf32>
    %30 = vector.broadcast %27 : vector<64x1xf32> to vector<64x16xf32>
    %31 = arith.mulf %19, %30 : vector<64x16xf32>
    %32 = vector.broadcast %28 : vector<1x16xf32> to vector<64x16xf32>
    %33 = arith.mulf %31, %32 : vector<64x16xf32>
    %34 = vector.broadcast %29 : vector<1x16xf32> to vector<64x16xf32>
    %35 = arith.addf %33, %34 : vector<64x16xf32>
    %c0_17 = arith.constant 0 : index
    %c0_18 = arith.constant 0 : index
    %36 = vector.load %arg6[%c0_17, %c0_18] : memref<64x16xf32, #tpu.memory_space<vmem>>, vector<64x16xf32>
    tpu.vector_store %arg6[%c0_17, %c0_18], %35 {strides = array<i32>} : memref<64x16xf32, #tpu.memory_space<vmem>>, vector<64x16xf32>,
    return
  }
  func.func @transform_0(%arg0: i32) -> (i32, i32) {
    %c0_i32 = arith.constant 0 : i32
    %c0_i32_0 = arith.constant 0 : i32
    return %arg0, %c0_i32 : i32, i32
  }
  func.func @transform_1(%arg0: i32) -> (i32, i32) {
    %c0_i32 = arith.constant 0 : i32
    %c0_i32_0 = arith.constant 0 : i32
    %c0_i32_1 = arith.constant 0 : i32
    return %c0_i32, %c0_i32_0 : i32, i32
  }
  func.func @transform_2(%arg0: i32) -> (i32, i32) {
    %c0_i32 = arith.constant 0 : i32
    %c0_i32_0 = arith.constant 0 : i32
    %c0_i32_1 = arith.constant 0 : i32
    return %c0_i32, %c0_i32_0 : i32, i32
  }
  func.func @transform_3(%arg0: i32) -> (i32, i32) {
    %c0_i32 = arith.constant 0 : i32
    %c0_i32_0 = arith.constant 0 : i32
    %c0_i32_1 = arith.constant 0 : i32
    return %c0_i32, %c0_i32_0 : i32, i32
  }
  func.func @transform_4(%arg0: i32) -> (i32, i32) {
    %c0_i32 = arith.constant 0 : i32
    %c0_i32_0 = arith.constant 0 : i32
    %c0_i32_1 = arith.constant 0 : i32
    return %c0_i32, %c0_i32_0 : i32, i32
  }
  func.func @transform_5(%arg0: i32) -> (i32, i32) {
    %c0_i32 = arith.constant 0 : i32
    %c0_i32_0 = arith.constant 0 : i32
    return %arg0, %c0_i32 : i32, i32
  }
}

</mosaic_0001>

<llo_original>
// kernel: tpu_custom_call.1
$region0: #{tpu_custom_call.1}
  #allocation0 [shape = 'u32[]', space=smem, size = 0x4, offset = 0x4, fixed_abs, tag = 'smem constant byte address 0x4 - core index']
  #allocation1 [shape = 'u32[144,128]{1,0:T(1,128)}', space=vmem, size = 0x12000, scoped, tag = 'internal scratch']
  %s0 = inlined_call_operand.vmem [shape: f32[512,16], index: 0, kind: input, shape index: {}]
  %s1 = inlined_call_operand.vmem [shape: f32[16,256], index: 1, kind: input, shape index: {}]
  %s2 = inlined_call_operand.vmem [shape: f32[1,256], index: 2, kind: input, shape index: {}]
  %s3 = inlined_call_operand.vmem [shape: f32[128,128], index: 3, kind: input, shape index: {}]
  %s4 = inlined_call_operand.vmem [shape: f32[2,16], index: 4, kind: input, shape index: {}]
  %s5 = inlined_call_operand.vmem [shape: f32[512,16], index: 5, kind: output, shape index: {}]
  %s6 = sld [smem:[#allocation0]]
  $region53: #{tpu_custom_call.1} parent=0
    _
  %s8 = ssub.s32 1, %s6
  %s9 = scalar_select 0, %s8, %s6
  loop: start=0, step=1, limit=10
  $region2: #{tpu_custom_call.1} parent=0 // loop_pre_header
    _
  $region3: #{tpu_custom_call.1} parent=0 // loop_header
    %s11 = sphi 0, %s15
    %p12 = scmp.ge.s32.totalorder %s11, 10
    %s21 = sphi 0, %s23
    %s24 = sphi 0, %s21
    %s25 = sphi 0, %s24
    %s41 = sphi 0, %s25
    %s45 = sphi 0, %s45
    %s47 = sphi 0, %s45
    %s48 = sphi 0, %s47
    %s62 = sphi 0, %s48
    %s66 = sphi 0, %s66
    %s68 = sphi 0, %s66
    %s69 = sphi 0, %s68
    %s83 = sphi 0, %s69
    %s87 = sphi 0, %s87
    %s89 = sphi 0, %s87
    %s90 = sphi 0, %s89
    %s104 = sphi 0, %s90
    %s108 = sphi 0, %s108
    %s110 = sphi 0, %s108
    %s111 = sphi 0, %s110
    %s125 = sphi 0, %s111
    %s131 = sphi 0, %s133
    %s134 = sphi 0, %s131
    %s135 = sphi 0, %s134
    %s151 = sphi 0, %s135
  $region4: #{tpu_custom_call.1} parent=0 // loop_header_branch
    %14 = sbr.rel (%p12) target = $region8
  $region5: #{tpu_custom_call.1} parent=0 // loop_body
    %s16 = ssub.s32 %s11, 1
    %s17 = ssub.s32 %s11, 2
    %s18 = sadd.s32 %s11, 1
    %s19 = ssub.s32 %s11, %s18
    %p20 = scmp.eq.s32.totalorder %s19, 0
    %s22 = sadd.s32 %s21, 1
    %s23 = scalar_select %p20, %s21, %s22
    %p26 = pneg %p20
    %p27 = scmp.eq.s32.totalorder %s11, 7
    %p28 = por %p26, %p27
    %p29 = scmp.ne.s32.totalorder %s21, %s24
    %p30 = scmp.eq.s32.totalorder %s11, 0
    %p31 = por %p29, %p30
    %p32 = scmp.ne.s32.totalorder %s21, %s24
    %p33 = scmp.eq.s32.totalorder %s16, 7
    %p34 = por %p32, %p33
    %p35 = scmp.ne.s32.totalorder %s24, %s25
    %p36 = scmp.eq.s32.totalorder %s16, 0
    %p37 = por %p35, %p36
    %p38 = scmp.ne.s32.totalorder %s24, %s25
    %p39 = scmp.eq.s32.totalorder %s17, 7
    %p40 = por %p38, %p39
    %p42 = scmp.ne.s32.totalorder %s25, %s41
    %p43 = scmp.eq.s32.totalorder %s17, 0
    %p44 = por %p42, %p43
    %s46 = sadd.s32 %s45, 1
    %p49 = scmp.eq.s32.totalorder %s11, 7
    %p50 = scmp.ne.s32.totalorder %s45, %s47
    %p51 = scmp.eq.s32.totalorder %s11, 0
    %p52 = por %p50, %p51
    %p53 = scmp.ne.s32.totalorder %s45, %s47
    %p54 = scmp.eq.s32.totalorder %s16, 7
    %p55 = por %p53, %p54
    %p56 = scmp.ne.s32.totalorder %s47, %s48
    %p57 = scmp.eq.s32.totalorder %s16, 0
    %p58 = por %p56, %p57
    %p59 = scmp.ne.s32.totalorder %s47, %s48
    %p60 = scmp.eq.s32.totalorder %s17, 7
    %p61 = por %p59, %p60
    %p63 = scmp.ne.s32.totalorder %s48, %s62
    %p64 = scmp.eq.s32.totalorder %s17, 0
    %p65 = por %p63, %p64
    %s67 = sadd.s32 %s66, 1
    %p70 = scmp.eq.s32.totalorder %s11, 7
    %p71 = scmp.ne.s32.totalorder %s66, %s68
    %p72 = scmp.eq.s32.totalorder %s11, 0
    %p73 = por %p71, %p72
    %p74 = scmp.ne.s32.totalorder %s66, %s68
    %p75 = scmp.eq.s32.totalorder %s16, 7
    %p76 = por %p74, %p75
    %p77 = scmp.ne.s32.totalorder %s68, %s69
    %p78 = scmp.eq.s32.totalorder %s16, 0
    %p79 = por %p77, %p78
    %p80 = scmp.ne.s32.totalorder %s68, %s69
    %p81 = scmp.eq.s32.totalorder %s17, 7
    %p82 = por %p80, %p81
    %p84 = scmp.ne.s32.totalorder %s69, %s83
    %p85 = scmp.eq.s32.totalorder %s17, 0
    %p86 = por %p84, %p85
    %s88 = sadd.s32 %s87, 1
    %p91 = scmp.eq.s32.totalorder %s11, 7
    %p92 = scmp.ne.s32.totalorder %s87, %s89
    %p93 = scmp.eq.s32.totalorder %s11, 0
    %p94 = por %p92, %p93
    %p95 = scmp.ne.s32.totalorder %s87, %s89
    %p96 = scmp.eq.s32.totalorder %s16, 7
    %p97 = por %p95, %p96
    %p98 = scmp.ne.s32.totalorder %s89, %s90
    %p99 = scmp.eq.s32.totalorder %s16, 0
    %p100 = por %p98, %p99
    %p101 = scmp.ne.s32.totalorder %s89, %s90
    %p102 = scmp.eq.s32.totalorder %s17, 7
    %p103 = por %p101, %p102
    %p105 = scmp.ne.s32.totalorder %s90, %s104
    %p106 = scmp.eq.s32.totalorder %s17, 0
    %p107 = por %p105, %p106
    %s109 = sadd.s32 %s108, 1
    %p112 = scmp.eq.s32.totalorder %s11, 7
    %p113 = scmp.ne.s32.totalorder %s108, %s110
    %p114 = scmp.eq.s32.totalorder %s11, 0
    %p115 = por %p113, %p114
    %p116 = scmp.ne.s32.totalorder %s108, %s110
    %p117 = scmp.eq.s32.totalorder %s16, 7
    %p118 = por %p116, %p117
    %p119 = scmp.ne.s32.totalorder %s110, %s111
    %p120 = scmp.eq.s32.totalorder %s16, 0
    %p121 = por %p119, %p120
    %p122 = scmp.ne.s32.totalorder %s110, %s111
    %p123 = scmp.eq.s32.totalorder %s17, 7
    %p124 = por %p122, %p123
    %p126 = scmp.ne.s32.totalorder %s111, %s125
    %p127 = scmp.eq.s32.totalorder %s17, 0
    %p128 = por %p126, %p127
    %s129 = ssub.s32 %s11, %s18
    %p130 = scmp.eq.s32.totalorder %s129, 0
    %s132 = sadd.s32 %s131, 1
    %s133 = scalar_select %p130, %s131, %s132
    %p136 = pneg %p130
    %p137 = scmp.eq.s32.totalorder %s11, 7
    %p138 = por %p136, %p137
    %p139 = scmp.ne.s32.totalorder %s131, %s134
    %p140 = scmp.eq.s32.totalorder %s11, 0
    %p141 = por %p139, %p140
    %p142 = scmp.ne.s32.totalorder %s131, %s134
    %p143 = scmp.eq.s32.totalorder %s16, 7
    %p144 = por %p142, %p143
    %p145 = scmp.ne.s32.totalorder %s134, %s135
    %p146 = scmp.eq.s32.totalorder %s16, 0
    %p147 = por %p145, %p146
    %p148 = scmp.ne.s32.totalorder %s134, %s135
    %p149 = scmp.eq.s32.totalorder %s17, 7
    %p150 = por %p148, %p149
    %p152 = scmp.ne.s32.totalorder %s135, %s151
    %p153 = scmp.eq.s32.totalorder %s17, 0
    %p154 = por %p152, %p153
    %p155 = scmp.le.s32.totalorder 1, %s11
    %p156 = scmp.lt.s32.totalorder %s11, 9
    %p157 = pnand %p155, %p156
    %p158 = pneg %p157
    // Predicated region
    $region9: #{tpu_custom_call.1} parent=5 // pred_check
      _
    $region10: #{tpu_custom_call.1} parent=5 // pred_check_branch
      %160 = sbr.rel (%p157) target = $region12
    $region11: #{tpu_custom_call.1} parent=5 // pred_region
      %s161 = ssub.s32 %s11, 1
      // Predicated region
      $region13: #{tpu_custom_call.1} parent=11 // pred_check
        %p162 = pneg %p58
      $region14: #{tpu_custom_call.1} parent=11 // pred_check_branch
        %164 = sbr.rel (%p162) target = $region16
      $region15: #{tpu_custom_call.1} parent=11 // pred_region
        _
      $region16: #{tpu_custom_call.1} parent=11 // pred_fallthru
        _
      // Predicated region
      $region17: #{tpu_custom_call.1} parent=11 // pred_check
        %p165 = pneg %p79
      $region18: #{tpu_custom_call.1} parent=11 // pred_check_branch
        %167 = sbr.rel (%p165) target = $region20
      $region19: #{tpu_custom_call.1} parent=11 // pred_region
        _
      $region20: #{tpu_custom_call.1} parent=11 // pred_fallthru
        _
      // Predicated region
      $region21: #{tpu_custom_call.1} parent=11 // pred_check
        %p168 = pneg %p100
      $region22: #{tpu_custom_call.1} parent=11 // pred_check_branch
        %170 = sbr.rel (%p168) target = $region24
      $region23: #{tpu_custom_call.1} parent=11 // pred_region
        _
      $region24: #{tpu_custom_call.1} parent=11 // pred_fallthru
        _
      // Predicated region
      $region25: #{tpu_custom_call.1} parent=11 // pred_check
        %p171 = pneg %p121
      $region26: #{tpu_custom_call.1} parent=11 // pred_check_branch
        %173 = sbr.rel (%p171) target = $region28
      $region27: #{tpu_custom_call.1} parent=11 // pred_region
        _
      $region28: #{tpu_custom_call.1} parent=11 // pred_fallthru
        _
    $region12: #{tpu_custom_call.1} parent=5 // pred_fallthru
      _
    %p174 = scmp.lt.s32.totalorder %s11, 8
    // Predicated region
    $region29: #{tpu_custom_call.1} parent=5 // pred_check
      %p175 = pneg %p174
    $region30: #{tpu_custom_call.1} parent=5 // pred_check_branch
      %177 = sbr.rel (%p175) target = $region32
    $region31: #{tpu_custom_call.1} parent=5 // pred_region
      // Predicated region
      $region33: #{tpu_custom_call.1} parent=31 // pred_check
        %p178 = pneg %p31
      $region34: #{tpu_custom_call.1} parent=31 // pred_check_branch
        %180 = sbr.rel (%p178) target = $region36
      $region35: #{tpu_custom_call.1} parent=31 // pred_region
        %s181 = smul.u32 8, %s11
        %p182 = scmp.lt.s32.totalorder %s181, 63
        %s183 = scalar_select %p182, %s181, 63
        %s184 = smul.addr %s183, 8
        %s185 = scalar_lea.vmem %s0, %s184
        %s186 = smul.u32 8, %s11
      $region36: #{tpu_custom_call.1} parent=31 // pred_fallthru
        _
    $region32: #{tpu_custom_call.1} parent=5 // pred_fallthru
      _
    %p187 = scmp.le.s32.totalorder 1, %s11
    %p188 = scmp.lt.s32.totalorder %s11, 9
    %p189 = pnand %p187, %p188
    %p190 = pneg %p189
    // Predicated region
    $region37: #{tpu_custom_call.1} parent=5 // pred_check
      _
    $region38: #{tpu_custom_call.1} parent=5 // pred_check_branch
      %192 = sbr.rel (%p189) target = $region40
    $region39: #{tpu_custom_call.1} parent=5 // pred_region
      %s193 = ssub.s32 %s11, 1
      %s194 = smul.u32 8, %s16
      %p195 = scmp.lt.s32.totalorder %s194, 63
      %s196 = scalar_select %p195, %s194, 63
      %s197 = smul.addr %s196, 8
      %s198 = scalar_lea.vmem %s0, %s197
      %p199 = pneg %p37
      %p200 = pneg %p34
      %p201 = pneg %p58
      %p202 = pneg %p55
      %p203 = pneg %p79
      %p204 = pneg %p76
      %p205 = pneg %p100
      %p206 = pneg %p97
      %p207 = pneg %p121
      %p208 = pneg %p118
      %p209 = pneg %p147
      %p210 = pneg %p144
      %s211 = smul.u32 8, %s16
      %p212 = scmp.lt.s32.totalorder %s211, 63
      %s213 = scalar_select %p212, %s211, 63
      %s214 = smul.addr %s213, 8
      %s215 = scalar_lea.vmem %s5, %s214
      %s216 = smul.u32 8, %s16
      %p217 = scmp.lt.s32.totalorder %s216, 63
      %s218 = scalar_select %p217, %s216, 63
      %s219 = smul.addr %s218, 8
      %s220 = scalar_lea.vmem %s0, %s219
      %s221 = smul.u32 8, %s16
      %s222 = smul.u32 8, %s16
      %p223 = scmp.lt.s32.totalorder %s222, 63
      %s224 = scalar_select %p223, %s222, 63
      %s225 = smul.addr %s224, 8
      %s226 = scalar_lea.vmem %s5, %s225
      %s227 = smul.u32 8, %s16
      %v228 = vld [vmem:[%s220] sm:$0xff]
      %v229 = vld [vmem:[%s220 + $0x8] sm:$0xff]
      %v230 = vld [vmem:[%s220 + $0x10] sm:$0xff]
      %v231 = vld [vmem:[%s220 + $0x18] sm:$0xff]
      %v232 = vld [vmem:[%s220 + $0x20] sm:$0xff]
      %v233 = vld [vmem:[%s220 + $0x28] sm:$0xff]
      %v234 = vld [vmem:[%s220 + $0x30] sm:$0xff]
      %v235 = vld [vmem:[%s220 + $0x38] sm:$0xff]
      %v236 = vld [vmem:[%s1] sm:$0xff]
      %v237 = vld [vmem:[%s1 + $0x8] sm:$0xff]
      %v238 = vld [vmem:[%s1 + $0x10] sm:$0xff]
      %v239 = vld [vmem:[%s1 + $0x18] sm:$0xff]
      %v240 = vld [vmem:[%s2] sm:$0x3]
      %v242 = vlaneseq
      %v243 = vshrl.u32 %v242, 7
      %v244 = vsub.s32 0, %v243
      %v245 = vrot.slane %v240, %v244
      %v246 = vlaneseq
      %v247 = vshrl.u32 %v246, 7
      %v248 = vsub.s32 1, %v247
      %v249 = vrot.slane %v240, %v248
      %vm252 = vcmask 130048
      %v254 = vsel %vm252, %v228, 0
      %v257 = vsel %vm252, %v229, 0
      %v260 = vsel %vm252, %v230, 0
      %v263 = vsel %vm252, %v231, 0
      %v266 = vsel %vm252, %v232, 0
      %v269 = vsel %vm252, %v233, 0
      %v272 = vsel %vm252, %v234, 0
      %v275 = vsel %vm252, %v235, 0
      %277 = vmatprep.subr.mxu0 0.0
      %278 = vmatpush1.msra.mxu0 0.0
      %279 = vmatprep.subr.mxu0 0.0
      %280 = vmatpush1.msra.mxu0 0.0
      %281 = vmatprep.subr.mxu0 0.0
      %282 = vmatpush1.msra.mxu0 0.0
      %283 = vmatprep.subr.mxu0 0.0
      %284 = vmatpush1.msra.mxu0 0.0
      %285 = vmatprep.subr.mxu0 0.0
      %286 = vmatpush1.msra.mxu0 0.0
      %287 = vmatprep.subr.mxu0 0.0
      %288 = vmatpush1.msra.mxu0 0.0
      %289 = vmatprep.subr.mxu0 0.0
      %290 = vmatpush1.msra.mxu0 0.0
      %291 = vmatprep.subr.mxu0 0.0
      %292 = vmatpush1.msra.mxu0 0.0
      %293 = vmatprep.subr.mxu0 0.0
      %294 = vmatpush1.msra.mxu0 0.0
      %295 = vmatprep.subr.mxu0 0.0
      %296 = vmatpush1.msra.mxu0 0.0
      %297 = vmatprep.subr.mxu0 0.0
      %298 = vmatpush1.msra.mxu0 0.0
      %299 = vmatprep.subr.mxu0 0.0
      %300 = vmatpush1.msra.mxu0 0.0
      %301 = vmatprep.subr.mxu0 0.0
      %302 = vmatpush1.msra.mxu0 0.0
      %303 = vmatprep.subr.mxu0 0.0
      %304 = vmatpush1.msra.mxu0 0.0
      %305 = vmatprep.subr.mxu0 %v239
      %306 = vmatpush1.msra.mxu0 %v238
      %307 = vmatprep.subr.mxu0 %v237
      %308 = vmatpush1.msra.mxu0 %v236
      %309 = vmatprep.subr.mxu0 0.0
      %310 = vmatpush2.msra.mxu0 0.0
      %311 = vmatprep.subr.mxu0 0.0
      %312 = vmatpush2.msra.mxu0 0.0
      %313 = vmatprep.subr.mxu0 0.0
      %314 = vmatpush2.msra.mxu0 0.0
      %315 = vmatprep.subr.mxu0 0.0
      %316 = vmatpush2.msra.mxu0 0.0
      %317 = vmatprep.subr.mxu0 0.0
      %318 = vmatpush2.msra.mxu0 0.0
      %319 = vmatprep.subr.mxu0 0.0
      %320 = vmatpush2.msra.mxu0 0.0
      %321 = vmatprep.subr.mxu0 0.0
      %322 = vmatpush2.msra.mxu0 0.0
      %323 = vmatprep.subr.mxu0 0.0
      %324 = vmatpush2.msra.mxu0 0.0
      %325 = vmatprep.subr.mxu0 0.0
      %326 = vmatpush2.msra.mxu0 0.0
      %327 = vmatprep.subr.mxu0 0.0
      %328 = vmatpush2.msra.mxu0 0.0
      %329 = vmatprep.subr.mxu0 0.0
      %330 = vmatpush2.msra.mxu0 0.0
      %331 = vmatprep.subr.mxu0 0.0
      %332 = vmatpush2.msra.mxu0 0.0
      %333 = vmatprep.subr.mxu0 0.0
      %334 = vmatpush2.msra.mxu0 0.0
      %335 = vmatprep.subr.mxu0 0.0
      %336 = vmatpush2.msra.mxu0 0.0
      %337 = vmatprep.subr.mxu0 0.0
      %338 = vmatpush2.msra.mxu0 0.0
      %339 = vmatprep.subr.mxu0 0.0
      %340 = vmatpush2.msra.mxu0 0.0
      %341 = vmatprep.mubr.f32.mxu0 0.0
      %342 = vmatmul.mubr.f32.gmra.mxu0 %v254
      %v343 = vpop.f32.mrf.mxu0
      %v344 = vadd.f32 %v245, %v343
      %v345 = vpop.f32.mrf.mxu0
      %v346 = vadd.f32 %v249, %v345
      %347 = vmatprep.mubr.f32.mxu0 0.0
      %348 = vmatmul.mubr.f32.gmra.mxu0 %v257
      %v349 = vpop.f32.mrf.mxu0
      %v350 = vadd.f32 %v245, %v349
      %v351 = vpop.f32.mrf.mxu0
      %v352 = vadd.f32 %v249, %v351
      %353 = vmatprep.mubr.f32.mxu0 0.0
      %354 = vmatmul.mubr.f32.gmra.mxu0 %v260
      %v355 = vpop.f32.mrf.mxu0
      %v356 = vadd.f32 %v245, %v355
      %v357 = vpop.f32.mrf.mxu0
      %v358 = vadd.f32 %v249, %v357
      %359 = vmatprep.mubr.f32.mxu0 0.0
      %360 = vmatmul.mubr.f32.gmra.mxu0 %v263
      %v361 = vpop.f32.mrf.mxu0
      %v362 = vadd.f32 %v245, %v361
      %v363 = vpop.f32.mrf.mxu0
      %v364 = vadd.f32 %v249, %v363
      %365 = vmatprep.mubr.f32.mxu0 0.0
      %366 = vmatmul.mubr.f32.gmra.mxu0 %v266
      %v367 = vpop.f32.mrf.mxu0
      %v368 = vadd.f32 %v245, %v367
      %v369 = vpop.f32.mrf.mxu0
      %v370 = vadd.f32 %v249, %v369
      %371 = vmatprep.mubr.f32.mxu0 0.0
      %372 = vmatmul.mubr.f32.gmra.mxu0 %v269
      %v373 = vpop.f32.mrf.mxu0
      %v374 = vadd.f32 %v245, %v373
      %v375 = vpop.f32.mrf.mxu0
      %v376 = vadd.f32 %v249, %v375
      %377 = vmatprep.mubr.f32.mxu0 0.0
      %378 = vmatmul.mubr.f32.gmra.mxu0 %v272
      %v379 = vpop.f32.mrf.mxu0
      %v380 = vadd.f32 %v245, %v379
      %v381 = vpop.f32.mrf.mxu0
      %v382 = vadd.f32 %v249, %v381
      %383 = vmatprep.mubr.f32.mxu0 0.0
      %384 = vmatmul.mubr.f32.gmra.mxu0 %v275
      %v385 = vpop.f32.mrf.mxu0
      %v386 = vadd.f32 %v245, %v385
      %v387 = vpop.f32.mrf.mxu0
      %v388 = vadd.f32 %v249, %v387
      %389 = vdwg.mxu0
      %v390 = vmax.f32 %v344, 0.0
      %v391 = vmax.f32 %v350, 0.0
      %v392 = vmax.f32 %v356, 0.0
      %v393 = vmax.f32 %v362, 0.0
      %v394 = vmax.f32 %v368, 0.0
      %v395 = vmax.f32 %v374, 0.0
      %v396 = vmax.f32 %v380, 0.0
      %v397 = vmax.f32 %v386, 0.0
      %v398 = vld [vmem:[%s3] sm:$0xff]
      %v399 = vld [vmem:[%s3 + $0x8] sm:$0xff]
      %v400 = vld [vmem:[%s3 + $0x10] sm:$0xff]
      %v401 = vld [vmem:[%s3 + $0x18] sm:$0xff]
      %v402 = vld [vmem:[%s3 + $0x20] sm:$0xff]
      %v403 = vld [vmem:[%s3 + $0x28] sm:$0xff]
      %v404 = vld [vmem:[%s3 + $0x30] sm:$0xff]
      %v405 = vld [vmem:[%s3 + $0x38] sm:$0xff]
      %v406 = vld [vmem:[%s3 + $0x40] sm:$0xff]
      %v407 = vld [vmem:[%s3 + $0x48] sm:$0xff]
      %v408 = vld [vmem:[%s3 + $0x50] sm:$0xff]
      %v409 = vld [vmem:[%s3 + $0x58] sm:$0xff]
      %v410 = vld [vmem:[%s3 + $0x60] sm:$0xff]
      %v411 = vld [vmem:[%s3 + $0x68] sm:$0xff]
      %v412 = vld [vmem:[%s3 + $0x70] sm:$0xff]
      %v413 = vld [vmem:[%s3 + $0x78] sm:$0xff]
      %414 = vmatprep.subr.mxu0 0.0
      %415 = vmatpush1.msra.mxu0 %v413
      %416 = vmatprep.subr.mxu0 0.0
      %417 = vmatpush1.msra.mxu0 %v412
      %418 = vmatprep.subr.mxu0 0.0
      %419 = vmatpush1.msra.mxu0 %v411
      %420 = vmatprep.subr.mxu0 0.0
      %421 = vmatpush1.msra.mxu0 %v410
      %422 = vmatprep.subr.mxu0 0.0
      %423 = vmatpush1.msra.mxu0 %v409
      %424 = vmatprep.subr.mxu0 0.0
      %425 = vmatpush1.msra.mxu0 %v408
      %426 = vmatprep.subr.mxu0 0.0
      %427 = vmatpush1.msra.mxu0 %v407
      %428 = vmatprep.subr.mxu0 0.0
      %429 = vmatpush1.msra.mxu0 %v406
      %430 = vmatprep.subr.mxu0 0.0
      %431 = vmatpush1.msra.mxu0 %v405
      %432 = vmatprep.subr.mxu0 0.0
      %433 = vmatpush1.msra.mxu0 %v404
      %434 = vmatprep.subr.mxu0 0.0
      %435 = vmatpush1.msra.mxu0 %v403
      %436 = vmatprep.subr.mxu0 0.0
      %437 = vmatpush1.msra.mxu0 %v402
      %438 = vmatprep.subr.mxu0 0.0
      %439 = vmatpush1.msra.mxu0 %v401
      %440 = vmatprep.subr.mxu0 0.0
      %441 = vmatpush1.msra.mxu0 %v400
      %442 = vmatprep.subr.mxu0 0.0
      %443 = vmatpush1.msra.mxu0 %v399
      %444 = vmatprep.subr.mxu0 0.0
      %445 = vmatpush1.msra.mxu0 %v398
      %446 = vmatprep.subr.mxu0 0.0
      %447 = vmatpush2.msra.mxu0 0.0
      %448 = vmatprep.subr.mxu0 0.0
      %449 = vmatpush2.msra.mxu0 0.0
      %450 = vmatprep.subr.mxu0 0.0
      %451 = vmatpush2.msra.mxu0 0.0
      %452 = vmatprep.subr.mxu0 0.0
      %453 = vmatpush2.msra.mxu0 0.0
      %454 = vmatprep.subr.mxu0 0.0
      %455 = vmatpush2.msra.mxu0 0.0
      %456 = vmatprep.subr.mxu0 0.0
      %457 = vmatpush2.msra.mxu0 0.0
      %458 = vmatprep.subr.mxu0 0.0
      %459 = vmatpush2.msra.mxu0 0.0
      %460 = vmatprep.subr.mxu0 0.0
      %461 = vmatpush2.msra.mxu0 0.0
      %462 = vmatprep.subr.mxu0 0.0
      %463 = vmatpush2.msra.mxu0 0.0
      %464 = vmatprep.subr.mxu0 0.0
      %465 = vmatpush2.msra.mxu0 0.0
      %466 = vmatprep.subr.mxu0 0.0
      %467 = vmatpush2.msra.mxu0 0.0
      %468 = vmatprep.subr.mxu0 0.0
      %469 = vmatpush2.msra.mxu0 0.0
      %470 = vmatprep.subr.mxu0 0.0
      %471 = vmatpush2.msra.mxu0 0.0
      %472 = vmatprep.subr.mxu0 0.0
      %473 = vmatpush2.msra.mxu0 0.0
      %474 = vmatprep.subr.mxu0 0.0
      %475 = vmatpush2.msra.mxu0 0.0
      %476 = vmatprep.subr.mxu0 0.0
      %477 = vmatpush2.msra.mxu0 0.0
      %478 = vmatprep.mubr.f32.mxu0 0.0
      %479 = vmatmul.mubr.f32.gmra.mxu0 %v390
      %v480 = vpop.f32.mrf.mxu0
      %v481 = vadd.f32 0.0, %v480
      %v482 = vpop.f32.mrf.mxu0
      %483 = vmatprep.mubr.f32.mxu0 0.0
      %484 = vmatmul.mubr.f32.gmra.mxu0 %v391
      %v485 = vpop.f32.mrf.mxu0
      %v486 = vadd.f32 0.0, %v485
      %v487 = vpop.f32.mrf.mxu0
      %488 = vmatprep.mubr.f32.mxu0 0.0
      %489 = vmatmul.mubr.f32.gmra.mxu0 %v392
      %v490 = vpop.f32.mrf.mxu0
      %v491 = vadd.f32 0.0, %v490
      %v492 = vpop.f32.mrf.mxu0
      %493 = vmatprep.mubr.f32.mxu0 0.0
      %494 = vmatmul.mubr.f32.gmra.mxu0 %v393
      %v495 = vpop.f32.mrf.mxu0
      %v496 = vadd.f32 0.0, %v495
      %v497 = vpop.f32.mrf.mxu0
      %498 = vmatprep.mubr.f32.mxu0 0.0
      %499 = vmatmul.mubr.f32.gmra.mxu0 %v394
      %v500 = vpop.f32.mrf.mxu0
      %v501 = vadd.f32 0.0, %v500
      %v502 = vpop.f32.mrf.mxu0
      %503 = vmatprep.mubr.f32.mxu0 0.0
      %504 = vmatmul.mubr.f32.gmra.mxu0 %v395
      %v505 = vpop.f32.mrf.mxu0
      %v506 = vadd.f32 0.0, %v505
      %v507 = vpop.f32.mrf.mxu0
      %508 = vmatprep.mubr.f32.mxu0 0.0
      %509 = vmatmul.mubr.f32.gmra.mxu0 %v396
      %v510 = vpop.f32.mrf.mxu0
      %v511 = vadd.f32 0.0, %v510
      %v512 = vpop.f32.mrf.mxu0
      %513 = vmatprep.mubr.f32.mxu0 0.0
      %514 = vmatmul.mubr.f32.gmra.mxu0 %v397
      %v515 = vpop.f32.mrf.mxu0
      %v516 = vadd.f32 0.0, %v515
      %v517 = vpop.f32.mrf.mxu0
      %518 = vdwg.mxu0
      %v519 = vadd.f32 %v481, %v346
      %v520 = vadd.f32 %v486, %v352
      %v521 = vadd.f32 %v491, %v358
      %v522 = vadd.f32 %v496, %v364
      %v523 = vadd.f32 %v501, %v370
      %v524 = vadd.f32 %v506, %v376
      %v525 = vadd.f32 %v511, %v382
      %v526 = vadd.f32 %v516, %v388
      %v527 = vsel %vm252, %v519, 0.0
      %528 = vadd.xlane.f32.xlu0 %v527
      %v529 = vpop.xlane.xlu0 %528
      %v530 = vsel %vm252, %v520, 0.0
      %531 = vadd.xlane.f32.xlu0 %v530
      %v532 = vpop.xlane.xlu0 %531
      %v533 = vsel %vm252, %v521, 0.0
      %534 = vadd.xlane.f32.xlu0 %v533
      %v535 = vpop.xlane.xlu0 %534
      %v536 = vsel %vm252, %v522, 0.0
      %537 = vadd.xlane.f32.xlu0 %v536
      %v538 = vpop.xlane.xlu0 %537
      %v539 = vsel %vm252, %v523, 0.0
      %540 = vadd.xlane.f32.xlu0 %v539
      %v541 = vpop.xlane.xlu0 %540
      %v542 = vsel %vm252, %v524, 0.0
      %543 = vadd.xlane.f32.xlu0 %v542
      %v544 = vpop.xlane.xlu0 %543
      %v545 = vsel %vm252, %v525, 0.0
      %546 = vadd.xlane.f32.xlu0 %v545
      %v547 = vpop.xlane.xlu0 %546
      %v548 = vsel %vm252, %v526, 0.0
      %549 = vadd.xlane.f32.xlu0 %v548
      %v550 = vpop.xlane.xlu0 %549
      %v551 = vrcp.pop 16.0
      %v552 = vmul.f32 %v529, %v551
      %v553 = vmul.f32 %v532, %v551
      %v554 = vmul.f32 %v535, %v551
      %v555 = vmul.f32 %v538, %v551
      %v556 = vmul.f32 %v541, %v551
      %v557 = vmul.f32 %v544, %v551
      %v558 = vmul.f32 %v547, %v551
      %v559 = vmul.f32 %v550, %v551
      %v560 = vsub.f32 %v519, %v552
      %v561 = vsub.f32 %v520, %v553
      %v562 = vsub.f32 %v521, %v554
      %v563 = vsub.f32 %v522, %v555
      %v564 = vsub.f32 %v523, %v556
      %v565 = vsub.f32 %v524, %v557
      %v566 = vsub.f32 %v525, %v558
      %v567 = vsub.f32 %v526, %v559
      %v568 = vmul.f32 %v560, %v560
      %v569 = vmul.f32 %v561, %v561
      %v570 = vmul.f32 %v562, %v562
      %v571 = vmul.f32 %v563, %v563
      %v572 = vmul.f32 %v564, %v564
      %v573 = vmul.f32 %v565, %v565
      %v574 = vmul.f32 %v566, %v566
      %v575 = vmul.f32 %v567, %v567
      %v576 = vsel %vm252, %v568, 0.0
      %577 = vadd.xlane.f32.xlu0 %v576
      %v578 = vpop.xlane.xlu0 %577
      %v579 = vsel %vm252, %v569, 0.0
      %580 = vadd.xlane.f32.xlu0 %v579
      %v581 = vpop.xlane.xlu0 %580
      %v582 = vsel %vm252, %v570, 0.0
      %583 = vadd.xlane.f32.xlu0 %v582
      %v584 = vpop.xlane.xlu0 %583
      %v585 = vsel %vm252, %v571, 0.0
      %586 = vadd.xlane.f32.xlu0 %v585
      %v587 = vpop.xlane.xlu0 %586
      %v588 = vsel %vm252, %v572, 0.0
      %589 = vadd.xlane.f32.xlu0 %v588
      %v590 = vpop.xlane.xlu0 %589
      %v591 = vsel %vm252, %v573, 0.0
      %592 = vadd.xlane.f32.xlu0 %v591
      %v593 = vpop.xlane.xlu0 %592
      %v594 = vsel %vm252, %v574, 0.0
      %595 = vadd.xlane.f32.xlu0 %v594
      %v596 = vpop.xlane.xlu0 %595
      %v597 = vsel %vm252, %v575, 0.0
      %598 = vadd.xlane.f32.xlu0 %v597
      %v599 = vpop.xlane.xlu0 %598
      %v600 = vmul.f32 %v578, %v551
      %v601 = vmul.f32 %v581, %v551
      %v602 = vmul.f32 %v584, %v551
      %v603 = vmul.f32 %v587, %v551
      %v604 = vmul.f32 %v590, %v551
      %v605 = vmul.f32 %v593, %v551
      %v606 = vmul.f32 %v596, %v551
      %v607 = vmul.f32 %v599, %v551
      %v608 = vadd.f32 %v600, 1e-05
      %v609 = vadd.f32 %v601, 1e-05
      %v610 = vadd.f32 %v602, 1e-05
      %v611 = vadd.f32 %v603, 1e-05
      %v612 = vadd.f32 %v604, 1e-05
      %v613 = vadd.f32 %v605, 1e-05
      %v614 = vadd.f32 %v606, 1e-05
      %v615 = vadd.f32 %v607, 1e-05
      %v616 = vrsqrt.pop %v608
      %v617 = vrsqrt.pop %v609
      %v618 = vrsqrt.pop %v610
      %v619 = vrsqrt.pop %v611
      %v620 = vrsqrt.pop %v612
      %v621 = vrsqrt.pop %v613
      %v622 = vrsqrt.pop %v614
      %v623 = vrsqrt.pop %v615
      %v624 = vld [vmem:[%s4] sm:$0x1]
      %v625 = vld [vmem:[%s4 + $0x1] sm:$0x1]
      %v626 = vmul.f32 %v560, %v616
      %v627 = vmul.f32 %v561, %v617
      %v628 = vmul.f32 %v562, %v618
      %v629 = vmul.f32 %v563, %v619
      %v630 = vmul.f32 %v564, %v620
      %v631 = vmul.f32 %v565, %v621
      %v632 = vmul.f32 %v566, %v622
      %v633 = vmul.f32 %v567, %v623
      %v634 = vlaneseq
      %v635 = vshrl.u32 %v634, 7
      %v636 = vsub.s32 0, %v635
      %v637 = vrot.slane %v624, %v636
      %v638 = vmul.f32 %v626, %v637
      %v639 = vmul.f32 %v627, %v637
      %v640 = vmul.f32 %v628, %v637
      %v641 = vmul.f32 %v629, %v637
      %v642 = vmul.f32 %v630, %v637
      %v643 = vmul.f32 %v631, %v637
      %v644 = vmul.f32 %v632, %v637
      %v645 = vmul.f32 %v633, %v637
      %v646 = vlaneseq
      %v647 = vshrl.u32 %v646, 7
      %v648 = vsub.s32 0, %v647
      %v649 = vrot.slane %v625, %v648
      %v650 = vadd.f32 %v638, %v649
      %v651 = vadd.f32 %v639, %v649
      %v652 = vadd.f32 %v640, %v649
      %v653 = vadd.f32 %v641, %v649
      %v654 = vadd.f32 %v642, %v649
      %v655 = vadd.f32 %v643, %v649
      %v656 = vadd.f32 %v644, %v649
      %v657 = vadd.f32 %v645, %v649
      %658 = vst.msk [vmem:[%s226] sm:$0xff] %vm252, %v650
      %659 = vst.msk [vmem:[%s226 + $0x8] sm:$0xff] %vm252, %v651
      %660 = vst.msk [vmem:[%s226 + $0x10] sm:$0xff] %vm252, %v652
      %661 = vst.msk [vmem:[%s226 + $0x18] sm:$0xff] %vm252, %v653
      %662 = vst.msk [vmem:[%s226 + $0x20] sm:$0xff] %vm252, %v654
      %663 = vst.msk [vmem:[%s226 + $0x28] sm:$0xff] %vm252, %v655
      %664 = vst.msk [vmem:[%s226 + $0x30] sm:$0xff] %vm252, %v656
      %665 = vst.msk [vmem:[%s226 + $0x38] sm:$0xff] %vm252, %v657
      %s666 = smul.u32 8, %s16
      %p667 = scmp.lt.s32.totalorder %s666, 63
      %s668 = scalar_select %p667, %s666, 63
      %s669 = smul.addr %s668, 8
      %s670 = scalar_lea.vmem %s5, %s669
      // Predicated region
      $region41: #{tpu_custom_call.1} parent=39 // pred_check
        %p671 = pneg %p144
      $region42: #{tpu_custom_call.1} parent=39 // pred_check_branch
        %673 = sbr.rel (%p671) target = $region44
      $region43: #{tpu_custom_call.1} parent=39 // pred_region
        %s674 = smul.u32 8, %s16
      $region44: #{tpu_custom_call.1} parent=39 // pred_fallthru
        _
    $region40: #{tpu_custom_call.1} parent=5 // pred_fallthru
      _
    %p675 = scmp.le.s32.totalorder 2, %s11
    // Predicated region
    $region45: #{tpu_custom_call.1} parent=5 // pred_check
      %p676 = pneg %p675
    $region46: #{tpu_custom_call.1} parent=5 // pred_check_branch
      %678 = sbr.rel (%p676) target = $region48
    $region47: #{tpu_custom_call.1} parent=5 // pred_region
      %s679 = ssub.s32 %s11, 2
      // Predicated region
      $region49: #{tpu_custom_call.1} parent=47 // pred_check
        %p680 = pneg %p150
      $region50: #{tpu_custom_call.1} parent=47 // pred_check_branch
        %682 = sbr.rel (%p680) target = $region52
      $region51: #{tpu_custom_call.1} parent=47 // pred_region
        %s683 = smul.u32 8, %s17
        %p684 = scmp.lt.s32.totalorder %s683, 63
        %s685 = scalar_select %p684, %s683, 63
        %s686 = smul.addr %s685, 8
        %s687 = scalar_lea.vmem %s5, %s686
      $region52: #{tpu_custom_call.1} parent=47 // pred_fallthru
        _
    $region48: #{tpu_custom_call.1} parent=5 // pred_fallthru
      _
  $region6: #{tpu_custom_call.1} parent=0 // loop_footer
    %s15 = sadd.s32 1, %s11
  $region7: #{tpu_custom_call.1} parent=0 // loop_footer_branch
    %10 = sbr.rel target = $region3
  $region8: #{tpu_custom_call.1} parent=0 // loop_exit
    _

</llo_original>
